<compile_context>
chip_gen: v6e
topology: v6e:2x2x1
jax: 0.10.0
libtpu: 0.0.40
codegen_flags: <defaults>
</compile_context>

<pallas_src>
import functools
import inspect

import jax
import jax.numpy as jnp
from jax.experimental import pallas as pl
from jax.experimental.pallas import tpu as pltpu


def _round_up(x, m):
    return (x + m - 1) // m * m


def _cdiv(a, b):
    return (a + b - 1) // b


# pl.Buffered(1) on constant-index inputs halves their VMEM footprint (the
# pipeline otherwise allocates two buffers even when the block never changes).
_HAS_BUFFERED = (
    hasattr(pl, "Buffered")
    and "pipeline_mode" in inspect.signature(pl.BlockSpec).parameters
)


def _resident_spec(shape, index_map):
    if _HAS_BUFFERED:
        return pl.BlockSpec(shape, index_map, pipeline_mode=pl.Buffered(1))
    return pl.BlockSpec(shape, index_map)


def _vmem_ceiling_bytes():
    # Generation-aware scoped-VMEM ceiling (128 MiB on v5e/v6e, 64 MiB on v7x).
    cap = 64 * 1024 * 1024  # conservative default: valid on every generation
    try:
        info = pltpu.get_tpu_info()
        cap = int(getattr(info, "vmem_capacity_bytes", cap)) or cap
    except Exception:
        pass
    return int(cap * 0.85)


# --------------------------- kernels ---------------------------------------


def _mlp_kernel_resident(x_ref, w1_ref, b1_ref, w2_ref, b2_ref, o_ref):
    # linear1: [tm, In] @ [In, H_p] on the MXU with f32 accumulation.
    h = jnp.dot(x_ref[...], w1_ref[...], preferred_element_type=jnp.float32)
    # bias + ReLU on the VPU in f32 (free filler under MXU slack).
    h = jnp.maximum(h + b1_ref[...].astype(jnp.float32), 0.0)
    # linear2: [tm, H_p] @ [H_p, C_p]; cast only if w2 is lower precision.
    out = jnp.dot(h.astype(w2_ref.dtype), w2_ref[...],
                  preferred_element_type=jnp.float32)
    o_ref[...] = (out + b2_ref[...].astype(jnp.float32)).astype(o_ref.dtype)


def _mlp_kernel_htiled(x_ref, w1_ref, b1_ref, w2_ref, b2_ref, o_ref, acc_ref):
    # Grid = (batch tiles, hidden tiles); hidden axis is a reduction for
    # linear2, accumulated into an f32 VMEM scratch.
    j = pl.program_id(1)

    @pl.when(j == 0)
    def _():
        acc_ref[...] = jnp.zeros_like(acc_ref)

    h = jnp.dot(x_ref[...], w1_ref[...], preferred_element_type=jnp.float32)
    h = jnp.maximum(h + b1_ref[...].astype(jnp.float32), 0.0)
    acc_ref[...] += jnp.dot(h.astype(w2_ref.dtype), w2_ref[...],
                            preferred_element_type=jnp.float32)

    @pl.when(j == pl.num_programs(1) - 1)
    def _():
        o_ref[...] = (acc_ref[...] + b2_ref[...].astype(jnp.float32)).astype(o_ref.dtype)


# --------------------------- wrapper ----------------------------------------


@functools.partial(jax.jit, static_argnames=("force_hidden_tiling",))
def neural_net2_forward(x, w1, b1, w2, b2, *, force_hidden_tiling=False):
    """Fused MLP forward. x: [B, In]; returns logits [B, C] (raw linear2
    output — no softmax, matching the PyTorch module)."""
    B, In = x.shape
    In_w, H = w1.shape
    H_w, C = w2.shape
    assert In == In_w and H == H_w and b1.shape == (H,) and b2.shape == (C,)

    out_dtype = x.dtype
    itemsize = jnp.dtype(x.dtype).itemsize
    w_itemsize = jnp.dtype(w1.dtype).itemsize

    # Pad only the lane-dense dims (MXU N-dims / output stores) to 128.  The
    # contraction dim In of x is left unpadded: its block spans the full last
    # dim, which is exempt from the (8, 128) rule.
    H_p = _round_up(H, 128)
    C_p = _round_up(C, 128)

    # ---- batch tiling: near-even tiles, capped at 512 rows; force >=2 tiles
    # for large batches so both v7x TensorCores get work. ----
    TM_MAX = 512
    tm_cap = min(TM_MAX, _round_up(B, 8))
    n_tiles = _cdiv(B, tm_cap)
    if n_tiles == 1 and B > 256:
        n_tiles = 2
    tm = _round_up(_cdiv(B, n_tiles), 8)
    B_p = n_tiles * tm

    # Zero padding is mathematically inert:
    #   - padded w1 cols / b1 entries are 0 -> ReLU(0)=0 -> killed by zero w2 rows
    #   - padded w2 cols / b2 entries only produce padded output cols (sliced off)
    #   - padded x rows only produce padded output rows (sliced off)
    x_p = jnp.pad(x, ((0, B_p - B), (0, 0)))
    w1_p = jnp.pad(w1, ((0, 0), (0, H_p - H)))
    b1_p = jnp.pad(b1.reshape(1, -1), ((0, 0), (0, H_p - H)))
    w2_p = jnp.pad(w2, ((0, H_p - H), (0, C_p - C)))
    b2_p = jnp.pad(b2.reshape(1, -1), ((0, 0), (0, C_p - C)))

    ceiling = _vmem_ceiling_bytes()
    weight_copies = 1 if _HAS_BUFFERED else 2

    def fudge(b):  # headroom for Mosaic internal scratch
        return int(b * 5 // 4) + (1 << 20)

    # Resident-path VMEM estimate: pipelined tiles + resident weights + f32
    # hidden intermediate + f32 pre-store accumulator.
    est_resident = (
        2 * tm * In * itemsize
        + 2 * tm * C_p * itemsize
        + weight_copies * (In * H_p + H_p + H_p * C_p + C_p) * w_itemsize
        + tm * H_p * 4
        + tm * C_p * 4
    )

    use_resident = (not force_hidden_tiling) and fudge(est_resident) <= ceiling

    if use_resident:
        # ---------------- fully fused, weights VMEM-resident -----------------
        vmem_limit = min(max(fudge(est_resident), 32 * 1024 * 1024), ceiling)
        out_p = pl.pallas_call(
            _mlp_kernel_resident,
            out_shape=jax.ShapeDtypeStruct((B_p, C_p), out_dtype),
            grid_spec=pltpu.PrefetchScalarGridSpec(
                num_scalar_prefetch=0,
                grid=(n_tiles,),
                in_specs=[
                    # x: tiled along batch, unpadded contraction dim, pipelined.
                    pl.BlockSpec((tm, In), lambda i: (i, 0)),
                    # Weights/biases: constant block index -> loaded once,
                    # single-buffered (Buffered(1)) to halve VMEM.
                    _resident_spec((In, H_p), lambda i: (0, 0)),
                    _resident_spec((1, H_p), lambda i: (0, 0)),
                    _resident_spec((H_p, C_p), lambda i: (0, 0)),
                    _resident_spec((1, C_p), lambda i: (0, 0)),
                ],
                # Lane-dense output tile (C_p multiple of 128) -> unmasked vst.
                out_specs=pl.BlockSpec((tm, C_p), lambda i: (i, 0)),
            ),
            compiler_params=pltpu.CompilerParams(
                dimension_semantics=("parallel",),
                vmem_limit_bytes=vmem_limit,
            ),
        )(x_p, w1_p, b1_p, w2_p, b2_p)
    else:
        # ------- fallback: tile the hidden dim (VMEM-limited, e.g. v7x) ------
        def htiled_vmem(tm_, th_):
            return (
                2 * tm_ * In * itemsize
                + 2 * (In * th_ + th_ + th_ * C_p) * w_itemsize
                + weight_copies * C_p * w_itemsize
                + 2 * tm_ * C_p * itemsize
                + tm_ * C_p * 4      # acc scratch
                + tm_ * th_ * 4      # f32 hidden slice
            )

        th = H_p
        while th > 128 and fudge(htiled_vmem(tm, th)) > ceiling:
            th = max(128, _round_up(th // 2, 128))
        H_t = _round_up(H_p, th)
        if H_t != H_p:
            w1_p = jnp.pad(w1_p, ((0, 0), (0, H_t - H_p)))
            b1_p = jnp.pad(b1_p, ((0, 0), (0, H_t - H_p)))
            w2_p = jnp.pad(w2_p, ((0, H_t - H_p), (0, 0)))

        vmem_limit = min(max(fudge(htiled_vmem(tm, th)), 32 * 1024 * 1024), ceiling)
        out_p = pl.pallas_call(
            _mlp_kernel_htiled,
            out_shape=jax.ShapeDtypeStruct((B_p, C_p), out_dtype),
            grid_spec=pltpu.PrefetchScalarGridSpec(
                num_scalar_prefetch=0,
                grid=(n_tiles, H_t // th),
                in_specs=[
                    pl.BlockSpec((tm, In), lambda i, j: (i, 0)),
                    pl.BlockSpec((In, th), lambda i, j: (0, j)),
                    pl.BlockSpec((1, th), lambda i, j: (0, j)),
                    pl.BlockSpec((th, C_p), lambda i, j: (j, 0)),
                    _resident_spec((1, C_p), lambda i, j: (0, 0)),
                ],
                out_specs=pl.BlockSpec((tm, C_p), lambda i, j: (i, 0)),
                scratch_shapes=[pltpu.VMEM((tm, C_p), jnp.float32)],
            ),
            compiler_params=pltpu.CompilerParams(
                dimension_semantics=("parallel", "arbitrary"),
                vmem_limit_bytes=vmem_limit,
            ),
        )(x_p, w1_p, b1_p, w2_p, b2_p)

    return out_p[:B, :C]


def init_params(key, input_size, hidden_size, num_classes, dtype=jnp.float32):
    """Deterministic init mimicking nn.Linear's U(-1/sqrt(fan_in), 1/sqrt(fan_in))."""
    k1, k2, k3, k4 = jax.random.split(key, 4)
    bound1 = 1.0 / jnp.sqrt(input_size)
    bound2 = 1.0 / jnp.sqrt(hidden_size)
    # Stored as [fan_in, fan_out] (transpose of PyTorch's [out, in]).
    w1 = jax.random.uniform(k1, (input_size, hidden_size), dtype, -bound1, bound1)
    b1 = jax.random.uniform(k2, (hidden_size,), dtype, -bound1, bound1)
    w2 = jax.random.uniform(k3, (hidden_size, num_classes), dtype, -bound2, bound2)
    b2 = jax.random.uniform(k4, (num_classes,), dtype, -bound2, bound2)
    return w1, b1, w2, b2


if __name__ == "__main__":
    key = jax.random.PRNGKey(0)
    kx, kp = jax.random.split(key)

    batch, input_size, hidden_size, num_classes = 8, 32, 64, 16
    x = jax.random.normal(kx, (batch, input_size), jnp.float32)
    w1, b1, w2, b2 = init_params(kp, input_size, hidden_size, num_classes)

    # Pure-JAX reference of the same math (Linear -> ReLU -> Linear).
    ref = jnp.maximum(x @ w1 + b1, 0.0) @ w2 + b2

    # Main (resident-weight) path.
    out = jax.block_until_ready(neural_net2_forward(x, w1, b1, w2, b2))
    assert out.shape == (batch, num_classes)
    assert jnp.allclose(out, ref, atol=1e-5, rtol=1e-5)

    # Exercise the hidden-dim-tiled fallback (used when weights exceed VMEM).
    out2 = jax.block_until_ready(
        neural_net2_forward(x, w1, b1, w2, b2, force_hidden_tiling=True)
    )
    assert jnp.allclose(out2, ref, atol=1e-5, rtol=1e-5)

    print("KERNEL_OK")
</pallas_src>

<mosaic_0001>
module attributes {stable_mosaic.version = 11 : i64} {
  func.func @_mlp_kernel_resident(%arg0: i32, %arg1: memref<8x32xf32, #tpu.memory_space<vmem>>, %arg2: memref<32x128xf32, #tpu.memory_space<vmem>>, %arg3: memref<1x128xf32, #tpu.memory_space<vmem>>, %arg4: memref<128x128xf32, #tpu.memory_space<vmem>>, %arg5: memref<1x128xf32, #tpu.memory_space<vmem>>, %arg6: memref<8x128xf32, #tpu.memory_space<vmem>>) attributes {dimension_semantics = [#tpu.dimension_semantics<parallel>], iteration_bounds = array<i64: 1>, scalar_prefetch = 0 : i64, scratch_operands = 0 : i64, tpu.core_type = #tpu.core_type<tc>, window_params = [{transform_indices = @transform_0, window_bounds = array<i64: 8, 32>}, {pipeline_mode = #tpu.pipeline_mode<synchronous>, transform_indices = @transform_1, window_bounds = array<i64: 32, 128>}, {pipeline_mode = #tpu.pipeline_mode<synchronous>, transform_indices = @transform_2, window_bounds = array<i64: 1, 128>}, {pipeline_mode = #tpu.pipeline_mode<synchronous>, transform_indices = @transform_3, window_bounds = array<i64: 128, 128>}, {pipeline_mode = #tpu.pipeline_mode<synchronous>, transform_indices = @transform_4, window_bounds = array<i64: 1, 128>}, {transform_indices = @transform_5, window_bounds = array<i64: 8, 128>}]} {
    %c0 = arith.constant 0 : index
    %c0_0 = arith.constant 0 : index
    %0 = vector.load %arg1[%c0, %c0_0] : memref<8x32xf32, #tpu.memory_space<vmem>>, vector<8x32xf32>
    %c0_1 = arith.constant 0 : index
    %c0_2 = arith.constant 0 : index
    %1 = vector.load %arg2[%c0_1, %c0_2] : memref<32x128xf32, #tpu.memory_space<vmem>>, vector<32x128xf32>
    %cst = arith.constant dense<0.000000e+00> : vector<8x128xf32>
    %2 = tpu.matmul %0, %1, %cst {dimension_numbers = #tpu.dot_dimension_numbers<[1], [0], [0], [1], [0, 0, 1, 1], [], []>} : vector<8x32xf32>, vector<32x128xf32>, vector<8x128xf32> -> vector<8x128xf32>
    %c0_3 = arith.constant 0 : index
    %c0_4 = arith.constant 0 : index
    %3 = vector.load %arg3[%c0_3, %c0_4] : memref<1x128xf32, #tpu.memory_space<vmem>>, vector<1x128xf32>
    %4 = vector.broadcast %3 : vector<1x128xf32> to vector<8x128xf32>
    %5 = arith.addf %2, %4 : vector<8x128xf32>
    %cst_5 = arith.constant 0.000000e+00 : f32
    %6 = vector.broadcast %cst_5 : f32 to vector<8x128xf32>
    %7 = arith.maximumf %5, %6 : vector<8x128xf32>
    %c0_6 = arith.constant 0 : index
    %c0_7 = arith.constant 0 : index
    %8 = vector.load %arg4[%c0_6, %c0_7] : memref<128x128xf32, #tpu.memory_space<vmem>>, vector<128x128xf32>
    %cst_8 = arith.constant dense<0.000000e+00> : vector<8x128xf32>
    %9 = tpu.matmul %7, %8, %cst_8 {dimension_numbers = #tpu.dot_dimension_numbers<[1], [0], [0], [1], [0, 0, 1, 1], [], []>} : vector<8x128xf32>, vector<128x128xf32>, vector<8x128xf32> -> vector<8x128xf32>
    %c0_9 = arith.constant 0 : index
    %c0_10 = arith.constant 0 : index
    %10 = vector.load %arg5[%c0_9, %c0_10] : memref<1x128xf32, #tpu.memory_space<vmem>>, vector<1x128xf32>
    %11 = vector.broadcast %10 : vector<1x128xf32> to vector<8x128xf32>
    %12 = arith.addf %9, %11 : vector<8x128xf32>
    %c0_11 = arith.constant 0 : index
    %c0_12 = arith.constant 0 : index
    %13 = vector.load %arg6[%c0_11, %c0_12] : memref<8x128xf32, #tpu.memory_space<vmem>>, vector<8x128xf32>
    tpu.vector_store %arg6[%c0_11, %c0_12], %12 {strides = array<i32>} : memref<8x128xf32, #tpu.memory_space<vmem>>, vector<8x128xf32>,
    return
  }
  func.func @transform_0(%arg0: i32) -> (i32, i32) {
    %c0_i32 = arith.constant 0 : i32
    %c0_i32_0 = arith.constant 0 : i32
    return %arg0, %c0_i32 : i32, i32
  }
  func.func @transform_1(%arg0: i32) -> (i32, i32) {
    %c0_i32 = arith.constant 0 : i32
    %c0_i32_0 = arith.constant 0 : i32
    %c0_i32_1 = arith.constant 0 : i32
    return %c0_i32, %c0_i32_0 : i32, i32
  }
  func.func @transform_2(%arg0: i32) -> (i32, i32) {
    %c0_i32 = arith.constant 0 : i32
    %c0_i32_0 = arith.constant 0 : i32
    %c0_i32_1 = arith.constant 0 : i32
    return %c0_i32, %c0_i32_0 : i32, i32
  }
  func.func @transform_3(%arg0: i32) -> (i32, i32) {
    %c0_i32 = arith.constant 0 : i32
    %c0_i32_0 = arith.constant 0 : i32
    %c0_i32_1 = arith.constant 0 : i32
    return %c0_i32, %c0_i32_0 : i32, i32
  }
  func.func @transform_4(%arg0: i32) -> (i32, i32) {
    %c0_i32 = arith.constant 0 : i32
    %c0_i32_0 = arith.constant 0 : i32
    %c0_i32_1 = arith.constant 0 : i32
    return %c0_i32, %c0_i32_0 : i32, i32
  }
  func.func @transform_5(%arg0: i32) -> (i32, i32) {
    %c0_i32 = arith.constant 0 : i32
    %c0_i32_0 = arith.constant 0 : i32
    return %arg0, %c0_i32 : i32, i32
  }
}

</mosaic_0001>

<llo_original>
// kernel: neural_net2_forward.1
$region0: #{neural_net2_forward.1}
  #allocation0 [shape = 'u32[]', space=smem, size = 0x4, offset = 0x4, fixed_abs, tag = 'smem constant byte address 0x4 - core index']
  #allocation1 [shape = 'u32[144,128]{1,0:T(1,128)}', space=vmem, size = 0x12000, scoped, tag = 'internal scratch']
  %s0 = inlined_call_operand.vmem [shape: f32[8,32], index: 0, kind: input, shape index: {}]
  %s1 = inlined_call_operand.vmem [shape: f32[32,128], index: 1, kind: input, shape index: {}]
  %s2 = inlined_call_operand.vmem [shape: f32[1,128], index: 2, kind: input, shape index: {}]
  %s3 = inlined_call_operand.vmem [shape: f32[128,128], index: 3, kind: input, shape index: {}]
  %s4 = inlined_call_operand.vmem [shape: f32[1,128], index: 4, kind: input, shape index: {}]
  %s5 = inlined_call_operand.hbm [shape: f32[8,128], index: 5, kind: output, shape index: {}]
  %s6 = sld [smem:[#allocation0]]
  $region30: #{neural_net2_forward.1} parent=0
    _
  %s8 = ssub.s32 1, %s6
  %s9 = scalar_select 0, %s8, %s6
  $region1: #{neural_net2_forward.1} parent=0
    #allocation2 [shape = 'u8[4096]{0}', space=vmem, size = 0x1000, scoped, tag = 'output window, operand 0, single buffered']
    #allocation3 [shape = 's32[1]{0}', space=sflag, size = 0x4, scoped, tag = 'scoped memory for neural_net2_forward.1']
    %10 = vsyncpa [#allocation3], 0
    // Predicated region
    $region2: #{neural_net2_forward.1} parent=1 // pred_check
      _
    $region3: #{neural_net2_forward.1} parent=1 // pred_check_branch
      %12 = sbr.rel (0) target = $region5
    $region4: #{neural_net2_forward.1} parent=1 // pred_region
      _
    $region5: #{neural_net2_forward.1} parent=1 // pred_fallthru
      _
    // Predicated region
    $region6: #{neural_net2_forward.1} parent=1 // pred_check
      _
    $region7: #{neural_net2_forward.1} parent=1 // pred_check_branch
      %14 = sbr.rel (0) target = $region9
    $region8: #{neural_net2_forward.1} parent=1 // pred_region
      _
    $region9: #{neural_net2_forward.1} parent=1 // pred_fallthru
      _
    // Predicated region
    $region10: #{neural_net2_forward.1} parent=1 // pred_check
      _
    $region11: #{neural_net2_forward.1} parent=1 // pred_check_branch
      %16 = sbr.rel (0) target = $region13
    $region12: #{neural_net2_forward.1} parent=1 // pred_region
      _
    $region13: #{neural_net2_forward.1} parent=1 // pred_fallthru
      _
    // Predicated region
    $region14: #{neural_net2_forward.1} parent=1 // pred_check
      _
    $region15: #{neural_net2_forward.1} parent=1 // pred_check_branch
      %18 = sbr.rel (0) target = $region17
    $region16: #{neural_net2_forward.1} parent=1 // pred_region
      _
    $region17: #{neural_net2_forward.1} parent=1 // pred_fallthru
      _
    // Predicated region
    $region18: #{neural_net2_forward.1} parent=1 // pred_check
      _
    $region19: #{neural_net2_forward.1} parent=1 // pred_check_branch
      %20 = sbr.rel (0) target = $region21
    $region20: #{neural_net2_forward.1} parent=1 // pred_region
      _
    $region21: #{neural_net2_forward.1} parent=1 // pred_fallthru
      _
    %v21 = vld [vmem:[%s0] sm:$0xff]
    %v22 = vld [vmem:[%s1] sm:$0xff]
    %v23 = vld [vmem:[%s1 + $0x8] sm:$0xff]
    %v24 = vld [vmem:[%s1 + $0x10] sm:$0xff]
    %v25 = vld [vmem:[%s1 + $0x18] sm:$0xff]
    %v26 = vld [vmem:[%s2] sm:$0x1]
    %v28 = vlaneseq
    %v29 = vshrl.u32 %v28, 7
    %v30 = vsub.s32 0, %v29
    %v31 = vrot.slane %v26, %v30
    %vm33 = vcmask 261120
    %v35 = vsel %vm33, %v21, 0
    %37 = vmatprep.subr.mxu0 0.0
    %38 = vmatpush1.msra.mxu0 0.0
    %39 = vmatprep.subr.mxu0 0.0
    %40 = vmatpush1.msra.mxu0 0.0
    %41 = vmatprep.subr.mxu0 0.0
    %42 = vmatpush1.msra.mxu0 0.0
    %43 = vmatprep.subr.mxu0 0.0
    %44 = vmatpush1.msra.mxu0 0.0
    %45 = vmatprep.subr.mxu0 0.0
    %46 = vmatpush1.msra.mxu0 0.0
    %47 = vmatprep.subr.mxu0 0.0
    %48 = vmatpush1.msra.mxu0 0.0
    %49 = vmatprep.subr.mxu0 0.0
    %50 = vmatpush1.msra.mxu0 0.0
    %51 = vmatprep.subr.mxu0 0.0
    %52 = vmatpush1.msra.mxu0 0.0
    %53 = vmatprep.subr.mxu0 0.0
    %54 = vmatpush1.msra.mxu0 0.0
    %55 = vmatprep.subr.mxu0 0.0
    %56 = vmatpush1.msra.mxu0 0.0
    %57 = vmatprep.subr.mxu0 0.0
    %58 = vmatpush1.msra.mxu0 0.0
    %59 = vmatprep.subr.mxu0 0.0
    %60 = vmatpush1.msra.mxu0 0.0
    %61 = vmatprep.subr.mxu0 0.0
    %62 = vmatpush1.msra.mxu0 %v25
    %63 = vmatprep.subr.mxu0 0.0
    %64 = vmatpush1.msra.mxu0 %v24
    %65 = vmatprep.subr.mxu0 0.0
    %66 = vmatpush1.msra.mxu0 %v23
    %67 = vmatprep.subr.mxu0 0.0
    %68 = vmatpush1.msra.mxu0 %v22
    %69 = vmatprep.subr.mxu0 0.0
    %70 = vmatpush2.msra.mxu0 0.0
    %71 = vmatprep.subr.mxu0 0.0
    %72 = vmatpush2.msra.mxu0 0.0
    %73 = vmatprep.subr.mxu0 0.0
    %74 = vmatpush2.msra.mxu0 0.0
    %75 = vmatprep.subr.mxu0 0.0
    %76 = vmatpush2.msra.mxu0 0.0
    %77 = vmatprep.subr.mxu0 0.0
    %78 = vmatpush2.msra.mxu0 0.0
    %79 = vmatprep.subr.mxu0 0.0
    %80 = vmatpush2.msra.mxu0 0.0
    %81 = vmatprep.subr.mxu0 0.0
    %82 = vmatpush2.msra.mxu0 0.0
    %83 = vmatprep.subr.mxu0 0.0
    %84 = vmatpush2.msra.mxu0 0.0
    %85 = vmatprep.subr.mxu0 0.0
    %86 = vmatpush2.msra.mxu0 0.0
    %87 = vmatprep.subr.mxu0 0.0
    %88 = vmatpush2.msra.mxu0 0.0
    %89 = vmatprep.subr.mxu0 0.0
    %90 = vmatpush2.msra.mxu0 0.0
    %91 = vmatprep.subr.mxu0 0.0
    %92 = vmatpush2.msra.mxu0 0.0
    %93 = vmatprep.subr.mxu0 0.0
    %94 = vmatpush2.msra.mxu0 0.0
    %95 = vmatprep.subr.mxu0 0.0
    %96 = vmatpush2.msra.mxu0 0.0
    %97 = vmatprep.subr.mxu0 0.0
    %98 = vmatpush2.msra.mxu0 0.0
    %99 = vmatprep.subr.mxu0 0.0
    %100 = vmatpush2.msra.mxu0 0.0
    %101 = vmatprep.mubr.f32.mxu0 0.0
    %102 = vmatmul.mubr.f32.gmra.mxu0 %v35
    %v103 = vpop.f32.mrf.mxu0
    %v104 = vadd.f32 %v31, %v103
    %v105 = vpop.f32.mrf.mxu0
    %106 = vdwg.mxu0
    %v107 = vmax.f32 %v104, 0.0
    %v108 = vld [vmem:[%s3] sm:$0xff]
    %v109 = vld [vmem:[%s3 + $0x8] sm:$0xff]
    %v110 = vld [vmem:[%s3 + $0x10] sm:$0xff]
    %v111 = vld [vmem:[%s3 + $0x18] sm:$0xff]
    %v112 = vld [vmem:[%s3 + $0x20] sm:$0xff]
    %v113 = vld [vmem:[%s3 + $0x28] sm:$0xff]
    %v114 = vld [vmem:[%s3 + $0x30] sm:$0xff]
    %v115 = vld [vmem:[%s3 + $0x38] sm:$0xff]
    %v116 = vld [vmem:[%s3 + $0x40] sm:$0xff]
    %v117 = vld [vmem:[%s3 + $0x48] sm:$0xff]
    %v118 = vld [vmem:[%s3 + $0x50] sm:$0xff]
    %v119 = vld [vmem:[%s3 + $0x58] sm:$0xff]
    %v120 = vld [vmem:[%s3 + $0x60] sm:$0xff]
    %v121 = vld [vmem:[%s3 + $0x68] sm:$0xff]
    %v122 = vld [vmem:[%s3 + $0x70] sm:$0xff]
    %v123 = vld [vmem:[%s3 + $0x78] sm:$0xff]
    %v124 = vld [vmem:[%s4] sm:$0x1]
    %v126 = vlaneseq
    %v127 = vshrl.u32 %v126, 7
    %v128 = vsub.s32 0, %v127
    %v129 = vrot.slane %v124, %v128
    %131 = vmatprep.subr.mxu0 0.0
    %132 = vmatpush1.msra.mxu0 %v123
    %133 = vmatprep.subr.mxu0 0.0
    %134 = vmatpush1.msra.mxu0 %v122
    %135 = vmatprep.subr.mxu0 0.0
    %136 = vmatpush1.msra.mxu0 %v121
    %137 = vmatprep.subr.mxu0 0.0
    %138 = vmatpush1.msra.mxu0 %v120
    %139 = vmatprep.subr.mxu0 0.0
    %140 = vmatpush1.msra.mxu0 %v119
    %141 = vmatprep.subr.mxu0 0.0
    %142 = vmatpush1.msra.mxu0 %v118
    %143 = vmatprep.subr.mxu0 0.0
    %144 = vmatpush1.msra.mxu0 %v117
    %145 = vmatprep.subr.mxu0 0.0
    %146 = vmatpush1.msra.mxu0 %v116
    %147 = vmatprep.subr.mxu0 0.0
    %148 = vmatpush1.msra.mxu0 %v115
    %149 = vmatprep.subr.mxu0 0.0
    %150 = vmatpush1.msra.mxu0 %v114
    %151 = vmatprep.subr.mxu0 0.0
    %152 = vmatpush1.msra.mxu0 %v113
    %153 = vmatprep.subr.mxu0 0.0
    %154 = vmatpush1.msra.mxu0 %v112
    %155 = vmatprep.subr.mxu0 0.0
    %156 = vmatpush1.msra.mxu0 %v111
    %157 = vmatprep.subr.mxu0 0.0
    %158 = vmatpush1.msra.mxu0 %v110
    %159 = vmatprep.subr.mxu0 0.0
    %160 = vmatpush1.msra.mxu0 %v109
    %161 = vmatprep.subr.mxu0 0.0
    %162 = vmatpush1.msra.mxu0 %v108
    %163 = vmatprep.subr.mxu0 0.0
    %164 = vmatpush2.msra.mxu0 0.0
    %165 = vmatprep.subr.mxu0 0.0
    %166 = vmatpush2.msra.mxu0 0.0
    %167 = vmatprep.subr.mxu0 0.0
    %168 = vmatpush2.msra.mxu0 0.0
    %169 = vmatprep.subr.mxu0 0.0
    %170 = vmatpush2.msra.mxu0 0.0
    %171 = vmatprep.subr.mxu0 0.0
    %172 = vmatpush2.msra.mxu0 0.0
    %173 = vmatprep.subr.mxu0 0.0
    %174 = vmatpush2.msra.mxu0 0.0
    %175 = vmatprep.subr.mxu0 0.0
    %176 = vmatpush2.msra.mxu0 0.0
    %177 = vmatprep.subr.mxu0 0.0
    %178 = vmatpush2.msra.mxu0 0.0
    %179 = vmatprep.subr.mxu0 0.0
    %180 = vmatpush2.msra.mxu0 0.0
    %181 = vmatprep.subr.mxu0 0.0
    %182 = vmatpush2.msra.mxu0 0.0
    %183 = vmatprep.subr.mxu0 0.0
    %184 = vmatpush2.msra.mxu0 0.0
    %185 = vmatprep.subr.mxu0 0.0
    %186 = vmatpush2.msra.mxu0 0.0
    %187 = vmatprep.subr.mxu0 0.0
    %188 = vmatpush2.msra.mxu0 0.0
    %189 = vmatprep.subr.mxu0 0.0
    %190 = vmatpush2.msra.mxu0 0.0
    %191 = vmatprep.subr.mxu0 0.0
    %192 = vmatpush2.msra.mxu0 0.0
    %193 = vmatprep.subr.mxu0 0.0
    %194 = vmatpush2.msra.mxu0 0.0
    %195 = vmatprep.mubr.f32.mxu0 0.0
    %196 = vmatmul.mubr.f32.gmra.mxu0 %v107
    %v197 = vpop.f32.mrf.mxu0
    %v198 = vadd.f32 %v129, %v197
    %v199 = vpop.f32.mrf.mxu0
    %200 = vdwg.mxu0
    %201 = vst [vmem:[#allocation2] sm:$0xff] %v198
    // Predicated region
    $region22: #{neural_net2_forward.1} parent=1 // pred_check
      _
    $region23: #{neural_net2_forward.1} parent=1 // pred_check_branch
      %203 = sbr.rel (0) target = $region25
    $region24: #{neural_net2_forward.1} parent=1 // pred_region
      %s205 = ssub.s32 128, 128
      %206 = vsyncadd [#allocation3], %s205
      %s208 = sshll.u32 [#allocation2], 4
      %s209 = int_to_ptr.vmem [resolvable:$true] %s208
      %211 = dma.vmem_to_hbm [thread:$0]  %s209, 128, %s5, [#allocation3]
    $region25: #{neural_net2_forward.1} parent=1 // pred_fallthru
      _
    // Predicated region
    $region26: #{neural_net2_forward.1} parent=1 // pred_check
      _
    $region27: #{neural_net2_forward.1} parent=1 // pred_check_branch
      %213 = sbr.rel (0) target = $region29
    $region28: #{neural_net2_forward.1} parent=1 // pred_region
      %214 = dma.done [#allocation3], 128
    $region29: #{neural_net2_forward.1} parent=1 // pred_fallthru
      _
    %215 = vsyncpa [#allocation3], 1

</llo_original>
